<compile_context>
chip_gen: v6e
topology: v6e:2x2x1
jax: 0.10.0
libtpu: 0.0.40
codegen_flags: <defaults>
</compile_context>

<pallas_src>
import functools

import jax
import jax.numpy as jnp
from jax.experimental import pallas as pl
from jax.experimental.pallas import tpu as pltpu


def _nll_loss_kernel(pred_ref, target_ref, out_ref, *, total_n, tile_n):
    # pred_ref   : (tile_n, C) log-probabilities, native dtype (VMEM)
    # target_ref : (tile_n, 1) int32 class indices             (VMEM)
    # out_ref    : (1, 1)      f32 accumulator / final loss    (VMEM, resident)
    i = pl.program_id(0)

    @pl.when(i == 0)
    def _init():
        out_ref[...] = jnp.zeros_like(out_ref)

    # Cast after the (narrow-dtype) DMA; v5e has no bf16 VPU so go to f32 now.
    pred = pred_ref[...].astype(jnp.float32)            # (tile_n, C)
    tgt = target_ref[...]                                # (tile_n, 1) int32
    tn, c = pred.shape

    # Select pred[r, target[r]] with a lane-iota compare; mask rows of the
    # padded trailing block (row id >= total_n) at the same time.
    col_ids = jax.lax.broadcasted_iota(jnp.int32, (tn, c), 1)
    row_ids = i * tile_n + jax.lax.broadcasted_iota(jnp.int32, (tn, c), 0)
    mask = (row_ids < total_n) & (col_ids == tgt)        # (tile_n, C) bool
    # jnp.where = select (no multiply) -> no 0 * (-inf) NaN hazard.
    partial = jnp.sum(jnp.where(mask, pred, jnp.float32(0.0)))

    out_ref[...] = out_ref[...] + partial

    @pl.when(i == pl.num_programs(0) - 1)
    def _finalize():
        # mean reduction: -1/N * sum_i pred[i, target[i]]  (static constant)
        out_ref[...] = out_ref[...] * (-1.0 / total_n)


def _choose_tile_n(n, c, itemsize):
    """Pick a batch-tile size: big enough to pipeline well, small enough that
    2x double-buffered blocks stay far below v7x's 32 MiB scoped-VMEM default."""
    budget = 2 * 1024 * 1024                       # ~2 MiB per pred block
    t = max(8, min(n, budget // max(1, c * itemsize)))
    t = (t // 8) * 8                               # sublane multiple
    if t >= n:
        return n                                   # full-dim block is always legal
    return max(8, t)


def get_loss(pred, target, trans_feat=None, *, tile_n=None):
    """JAX/Pallas equivalent of get_loss().forward(pred, target, trans_feat).

    pred       : (N, C) log-probabilities (f32 or bf16; kept in native dtype)
    target     : (N,)   integer class indices
    trans_feat : unused (kept for signature parity with the PyTorch module)
    returns    : scalar float32 mean NLL loss
    """
    del trans_feat  # unused, as in the reference module
    n, c = pred.shape
    if tile_n is None:
        tile_n = _choose_tile_n(n, c, pred.dtype.itemsize)
    grid = pl.cdiv(n, tile_n)

    target2d = target.astype(jnp.int32).reshape(n, 1)
    kernel = functools.partial(_nll_loss_kernel, total_n=n, tile_n=tile_n)

    out = pl.pallas_call(
        kernel,
        out_shape=jax.ShapeDtypeStruct((1, 1), jnp.float32),
        grid_spec=pltpu.PrefetchScalarGridSpec(
            num_scalar_prefetch=0,
            grid=(grid,),
            in_specs=[
                pl.BlockSpec((tile_n, c), lambda i: (i, 0)),  # pred, streamed
                pl.BlockSpec((tile_n, 1), lambda i: (i, 0)),  # target, streamed
            ],
            # constant block index -> resident accumulator across the grid
            out_specs=pl.BlockSpec((1, 1), lambda i: (0, 0)),
        ),
        compiler_params=pltpu.CompilerParams(
            dimension_semantics=("arbitrary",),   # reduction axis
        ),
    )(pred, target2d)     # pred passed in native dtype (no wrapper upcast)
    return out[0, 0]


if __name__ == "__main__":
    key = jax.random.PRNGKey(0)
    k_logits, k_target, k_feat = jax.random.split(key, 3)

    # ---- primary check: small batch, single block --------------------------
    N, C = 8, 32
    logits = jax.random.normal(k_logits, (N, C), dtype=jnp.float32)
    pred = jax.nn.log_softmax(logits, axis=-1)          # log-probs, as nll_loss expects
    target = jax.random.randint(k_target, (N,), 0, C, dtype=jnp.int32)
    trans_feat = jax.random.normal(k_feat, (N, 3, 3), dtype=jnp.float32)  # unused

    loss = get_loss(pred, target, trans_feat)
    jax.block_until_ready(loss)
    ref = -jnp.mean(pred[jnp.arange(N), target])
    assert jnp.allclose(loss, ref, atol=1e-6, rtol=1e-6), (loss, ref)

    # ---- tiled path check: multiple blocks + padded trailing block ---------
    N2, C2 = 20, 40
    k2a, k2b = jax.random.split(jax.random.PRNGKey(1))
    logits2 = jax.random.normal(k2a, (N2, C2), dtype=jnp.float32)
    pred2 = jax.nn.log_softmax(logits2, axis=-1)
    target2 = jax.random.randint(k2b, (N2,), 0, C2, dtype=jnp.int32)
    loss2 = get_loss(pred2, target2, None, tile_n=8)    # grid=3, last block padded
    jax.block_until_ready(loss2)
    ref2 = -jnp.mean(pred2[jnp.arange(N2), target2])
    assert jnp.allclose(loss2, ref2, atol=1e-6, rtol=1e-6), (loss2, ref2)

    # ---- bf16 check: pred is DMA'd narrow, upcast in-kernel ----------------
    pred_bf16 = pred.astype(jnp.bfloat16)
    loss3 = get_loss(pred_bf16, target, trans_feat)
    jax.block_until_ready(loss3)
    ref3 = -jnp.mean(pred_bf16.astype(jnp.float32)[jnp.arange(N), target])
    assert jnp.allclose(loss3, ref3, atol=1e-3, rtol=1e-3), (loss3, ref3)

    print("KERNEL_OK")
</pallas_src>

<mosaic_0001>
module attributes {stable_mosaic.version = 11 : i64} {
  func.func @_nll_loss_kernel(%arg0: i32, %arg1: memref<8x32xf32, #tpu.memory_space<vmem>>, %arg2: memref<8x1xi32, #tpu.memory_space<vmem>>, %arg3: memref<1x1xf32, #tpu.memory_space<vmem>>) attributes {dimension_semantics = [#tpu.dimension_semantics<arbitrary>], iteration_bounds = array<i64: 1>, scalar_prefetch = 0 : i64, scratch_operands = 0 : i64, tpu.core_type = #tpu.core_type<tc>, window_params = [{transform_indices = @transform_0, window_bounds = array<i64: 8, 32>}, {transform_indices = @transform_1, window_bounds = array<i64: 8, 1>}, {pipeline_mode = #tpu.pipeline_mode<synchronous>, transform_indices = @transform_2, window_bounds = array<i64: 1, 1>}]} {
    %c0_i32 = arith.constant 0 : i32
    %0 = arith.cmpi eq, %arg0, %c0_i32 : i32
    %1 = arith.extui %0 : i1 to i32
    %c0_i32_0 = arith.constant 0 : i32
    %2 = arith.cmpi ne, %1, %c0_i32_0 : i32
    scf.if %2 {
      %cst_12 = arith.constant 0.000000e+00 : f32
      %28 = vector.broadcast %cst_12 : f32 to vector<1x1xf32>
      %c0_13 = arith.constant 0 : index
      %c0_14 = arith.constant 0 : index
      %29 = vector.load %arg3[%c0_13, %c0_14] : memref<1x1xf32, #tpu.memory_space<vmem>>, vector<1x1xf32>
      tpu.vector_store %arg3[%c0_13, %c0_14], %28 {strides = array<i32>} : memref<1x1xf32, #tpu.memory_space<vmem>>, vector<1x1xf32>,
    } else {
    }
    %c0 = arith.constant 0 : index
    %c0_1 = arith.constant 0 : index
    %3 = vector.load %arg1[%c0, %c0_1] : memref<8x32xf32, #tpu.memory_space<vmem>>, vector<8x32xf32>
    %c0_2 = arith.constant 0 : index
    %c0_3 = arith.constant 0 : index
    %4 = vector.load %arg2[%c0_2, %c0_3] : memref<8x1xi32, #tpu.memory_space<vmem>>, vector<8x1xi32>
    %5 = tpu.iota {dimensions = array<i32: 1>} : vector<8x32xi32>
    %c8_i32 = arith.constant 8 : i32
    %6 = arith.muli %arg0, %c8_i32 : i32
    %7 = tpu.iota {dimensions = array<i32: 0>} : vector<8x32xi32>
    %8 = vector.broadcast %6 : i32 to vector<8x32xi32>
    %9 = arith.addi %8, %7 : vector<8x32xi32>
    %c8_i32_4 = arith.constant 8 : i32
    %10 = vector.broadcast %c8_i32_4 : i32 to vector<8x32xi32>
    %11 = arith.cmpi slt, %9, %10 : vector<8x32xi32>
    %12 = vector.broadcast %4 : vector<8x1xi32> to vector<8x32xi32>
    %13 = arith.cmpi eq, %5, %12 : vector<8x32xi32>
    %14 = arith.andi %11, %13 : vector<8x32xi1>
    %cst = arith.constant 0.000000e+00 : f32
    %15 = vector.broadcast %cst : f32 to vector<8x32xf32>
    %16 = arith.select %14, %3, %15 : vector<8x32xi1>, vector<8x32xf32>
    %17 = vector.shape_cast %16 : vector<8x32xf32> to vector<1x8x32xf32>
    %cst_5 = arith.constant dense<0.000000e+00> : vector<1xf32>
    %18 = vector.multi_reduction <add>, %17, %cst_5 [1, 2] : vector<1x8x32xf32> to vector<1xf32>
    %19 = vector.shape_cast %18 : vector<1xf32> to vector<1x1x1xf32>
    %20 = vector.extract %19[0, 0, 0] : f32 from vector<1x1x1xf32>
    %c0_6 = arith.constant 0 : index
    %c0_7 = arith.constant 0 : index
    %21 = vector.load %arg3[%c0_6, %c0_7] : memref<1x1xf32, #tpu.memory_space<vmem>>, vector<1x1xf32>
    %22 = vector.broadcast %20 : f32 to vector<1x1xf32>
    %23 = arith.addf %21, %22 : vector<1x1xf32>
    %c0_8 = arith.constant 0 : index
    %c0_9 = arith.constant 0 : index
    %24 = vector.load %arg3[%c0_8, %c0_9] : memref<1x1xf32, #tpu.memory_space<vmem>>, vector<1x1xf32>
    tpu.vector_store %arg3[%c0_8, %c0_9], %23 {strides = array<i32>} : memref<1x1xf32, #tpu.memory_space<vmem>>, vector<1x1xf32>,
    %c0_i32_10 = arith.constant 0 : i32
    %25 = arith.cmpi eq, %arg0, %c0_i32_10 : i32
    %26 = arith.extui %25 : i1 to i32
    %c0_i32_11 = arith.constant 0 : i32
    %27 = arith.cmpi ne, %26, %c0_i32_11 : i32
    scf.if %27 {
      %c0_12 = arith.constant 0 : index
      %c0_13 = arith.constant 0 : index
      %28 = vector.load %arg3[%c0_12, %c0_13] : memref<1x1xf32, #tpu.memory_space<vmem>>, vector<1x1xf32>
      %cst_14 = arith.constant -1.250000e-01 : f32
      %29 = vector.broadcast %cst_14 : f32 to vector<1x1xf32>
      %30 = arith.mulf %28, %29 : vector<1x1xf32>
      %c0_15 = arith.constant 0 : index
      %c0_16 = arith.constant 0 : index
      %31 = vector.load %arg3[%c0_15, %c0_16] : memref<1x1xf32, #tpu.memory_space<vmem>>, vector<1x1xf32>
      tpu.vector_store %arg3[%c0_15, %c0_16], %30 {strides = array<i32>} : memref<1x1xf32, #tpu.memory_space<vmem>>, vector<1x1xf32>,
    } else {
    }
    return
  }
  func.func @transform_0(%arg0: i32) -> (i32, i32) {
    %c0_i32 = arith.constant 0 : i32
    %c0_i32_0 = arith.constant 0 : i32
    return %arg0, %c0_i32 : i32, i32
  }
  func.func @transform_1(%arg0: i32) -> (i32, i32) {
    %c0_i32 = arith.constant 0 : i32
    %c0_i32_0 = arith.constant 0 : i32
    return %arg0, %c0_i32 : i32, i32
  }
  func.func @transform_2(%arg0: i32) -> (i32, i32) {
    %c0_i32 = arith.constant 0 : i32
    %c0_i32_0 = arith.constant 0 : i32
    %c0_i32_1 = arith.constant 0 : i32
    return %c0_i32, %c0_i32_0 : i32, i32
  }
}

</mosaic_0001>

<llo_original>
// kernel: tpu_custom_call.1
$region0: #{tpu_custom_call.1}
  #allocation0 [shape = 'u32[]', space=smem, size = 0x4, offset = 0x4, fixed_abs, tag = 'smem constant byte address 0x4 - core index']
  #allocation1 [shape = 'u32[144,128]{1,0:T(1,128)}', space=vmem, size = 0x12000, scoped, tag = 'internal scratch']
  %s0 = inlined_call_operand.vmem [shape: f32[8,32], index: 0, kind: input, shape index: {}]
  %s1 = inlined_call_operand.vmem [shape: s32[8,1], index: 1, kind: input, shape index: {}]
  %s2 = inlined_call_operand.hbm [shape: f32[1,1], index: 2, kind: output, shape index: {}]
  %s3 = sld [smem:[#allocation0]]
  $region26: #{tpu_custom_call.1} parent=0
    _
  %s5 = ssub.s32 1, %s3
  %s6 = scalar_select 0, %s5, %s3
  $region1: #{tpu_custom_call.1} parent=0
    #allocation2 [shape = 'u8[512]{0}', space=vmem, size = 0x400, scoped, tag = 'output window, operand 0, single buffered']
    #allocation3 [shape = 's32[1]{0}', space=sflag, size = 0x4, scoped, tag = 'scoped memory for tpu_custom_call.1']
    %7 = vsyncpa [#allocation3], 0
    // Predicated region
    $region2: #{tpu_custom_call.1} parent=1 // pred_check
      _
    $region3: #{tpu_custom_call.1} parent=1 // pred_check_branch
      %9 = sbr.rel (0) target = $region5
    $region4: #{tpu_custom_call.1} parent=1 // pred_region
      _
    $region5: #{tpu_custom_call.1} parent=1 // pred_fallthru
      _
    // Predicated region
    $region6: #{tpu_custom_call.1} parent=1 // pred_check
      _
    $region7: #{tpu_custom_call.1} parent=1 // pred_check_branch
      %11 = sbr.rel (0) target = $region9
    $region8: #{tpu_custom_call.1} parent=1 // pred_region
      _
    $region9: #{tpu_custom_call.1} parent=1 // pred_fallthru
      _
    %p12 = scmp.eq.s32.totalorder 0, 0
    // Predicated region
    $region10: #{tpu_custom_call.1} parent=1 // pred_check
      %p13 = pneg %p12
    $region11: #{tpu_custom_call.1} parent=1 // pred_check_branch
      %15 = sbr.rel (%p13) target = $region13
    $region12: #{tpu_custom_call.1} parent=1 // pred_region
      %vm16 = vcmask 0
      %17 = vst.msk [vmem:[#allocation2] sm:$0x1] %vm16, 0.0
    $region13: #{tpu_custom_call.1} parent=1 // pred_fallthru
      _
    %v18 = vld [vmem:[%s0] sm:$0xff]
    %v19 = vld [vmem:[%s1] sm:$0xff]
    %v20 = vlaneseq
    %v21 = vand.u32 %v20, 127
    %s22 = smul.u32 0, 8
    %v23 = vlaneseq
    %v24 = vshrl.u32 %v23, 7
    %v25 = vstv %s22
    %v26 = vadd.s32 %v25, %v24
    %vm27 = vcmp.lt.s32.totalorder %v26, 8
    %28 = vset.pattern.permute.xlu0 0
    %29 = vperm.xlu0 %28, %v19
    %v30 = vpop.permute.xlu0 %29
    %vm31 = vcmp.eq.s32.totalorder %v21, %v30
    %vm32 = vmand %vm27, %vm31
    %v33 = vsel %vm32, %v18, 0.0
    %vm34 = vcmask 261120
    %v35 = vsel %vm34, %v33, 0.0
    %36 = vadd.xlane.f32.xlu0 %v35
    %v37 = vpop.xlane.xlu0 %36
    %v38 = vrot.slane %v37, 4
    %v39 = vadd.f32 %v37, %v38
    %v40 = vrot.slane %v39, 2
    %v41 = vadd.f32 %v39, %v40
    %v42 = vrot.slane %v41, 1
    %v43 = vadd.f32 %v41, %v42
    %s44 = vtos %v43
    %v45 = vld [vmem:[#allocation2] sm:$0x1]
    %v46 = vstv %s44
    %v47 = vadd.f32 %v45, %v46
    %vm48 = vcmask 0
    %49 = vst.msk [vmem:[#allocation2] sm:$0x1] %vm48, %v47
    // Predicated region
    $region14: #{tpu_custom_call.1} parent=1 // pred_check
      %p50 = pneg %p12
    $region15: #{tpu_custom_call.1} parent=1 // pred_check_branch
      %52 = sbr.rel (%p50) target = $region17
    $region16: #{tpu_custom_call.1} parent=1 // pred_region
      %v53 = vld [vmem:[#allocation2] sm:$0x1]
      %v54 = vmul.f32 %v53, -0.125
      %55 = vst.msk [vmem:[#allocation2] sm:$0x1] %vm48, %v54
    $region17: #{tpu_custom_call.1} parent=1 // pred_fallthru
      _
    // Predicated region
    $region18: #{tpu_custom_call.1} parent=1 // pred_check
      _
    $region19: #{tpu_custom_call.1} parent=1 // pred_check_branch
      %57 = sbr.rel (0) target = $region21
    $region20: #{tpu_custom_call.1} parent=1 // pred_region
      %s59 = ssub.s32 16, 16
      %60 = vsyncadd [#allocation3], %s59
      %s62 = sshll.u32 [#allocation2], 4
      %s63 = int_to_ptr.vmem [resolvable:$true] %s62
      %65 = dma.vmem_to_hbm [thread:$0]  %s63, 16, %s2, [#allocation3]
    $region21: #{tpu_custom_call.1} parent=1 // pred_fallthru
      _
    // Predicated region
    $region22: #{tpu_custom_call.1} parent=1 // pred_check
      _
    $region23: #{tpu_custom_call.1} parent=1 // pred_check_branch
      %67 = sbr.rel (0) target = $region25
    $region24: #{tpu_custom_call.1} parent=1 // pred_region
      %68 = dma.done [#allocation3], 16
    $region25: #{tpu_custom_call.1} parent=1 // pred_fallthru
      _
    %69 = vsyncpa [#allocation3], 1

</llo_original>
